<compile_context>
chip_gen: v5e
topology: v5e:2x2
jax: 0.10.0
libtpu: 0.0.40
codegen_flags: <defaults>
</compile_context>

<pallas_src>
import functools

import jax
import jax.numpy as jnp
from jax.experimental import pallas as pl
from jax.experimental.pallas import tpu as pltpu


# ---------------------------------------------------------------------------
# Kernels
# ---------------------------------------------------------------------------

def _gn_fused_kernel(x_ref, w_ref, b_ref, agg_ref, o_ref, *, eps, inv_count):
    """Single-pass GroupNorm for one (Bn, Bc, HW) block covering whole groups.

    agg_ref is a (Bc, Bc) block-diagonal mask (1.0 where two channels share a
    group) used to fold per-channel partial sums into per-group sums.
    """
    x32 = x_ref[...].astype(jnp.float32)                        # (Bn, Bc, HW)

    # Per-channel lane reductions, then exact-f32 per-group fold via the mask.
    sum_c = jnp.sum(x32, axis=-1)                               # (Bn, Bc)
    sumsq_c = jnp.sum(x32 * x32, axis=-1)                       # (Bn, Bc)
    agg = agg_ref[...]                                          # (Bc, Bc)
    gsum = jnp.sum(sum_c[:, None, :] * agg[None, :, :], axis=-1)      # (Bn, Bc)
    gsumsq = jnp.sum(sumsq_c[:, None, :] * agg[None, :, :], axis=-1)  # (Bn, Bc)

    # Naive E[x^2] - E[x]^2 statistics (matches the reference module); clamp
    # guards tiny negative variance from cancellation.
    mean = gsum * inv_count
    var = jnp.maximum(gsumsq * inv_count - mean * mean, 0.0)
    inv_std = jax.lax.rsqrt(var + eps)                          # (Bn, Bc)

    w = w_ref[0]                                                # (1, Bc), f32
    b = b_ref[0]
    scale = w * inv_std                                         # (Bn, Bc)
    shift = b - mean * scale

    # Epilogue: re-read x from VMEM (bounds the f32 live range).  bf16 inputs
    # use a bf16 mul-add (native on v6e/v7x), otherwise f32.
    if o_ref.dtype == jnp.bfloat16:
        o_ref[...] = (x_ref[...] * scale[:, :, None].astype(jnp.bfloat16)
                      + shift[:, :, None].astype(jnp.bfloat16)).astype(o_ref.dtype)
    else:
        xe = x_ref[...].astype(jnp.float32)
        o_ref[...] = (xe * scale[:, :, None] + shift[:, :, None]).astype(o_ref.dtype)


def _gn_stats_kernel(x_ref, s1_ref, s2_ref):
    """Two-pass path, pass 1: accumulate per-channel sum / sum-of-squares over HW chunks."""
    x32 = x_ref[...].astype(jnp.float32)                        # (1, Bc, THW)
    ps1 = jnp.sum(x32, axis=-1, keepdims=True)                  # (1, Bc, 1)
    ps2 = jnp.sum(x32 * x32, axis=-1, keepdims=True)

    @pl.when(pl.program_id(2) == 0)
    def _():
        s1_ref[...] = jnp.zeros_like(s1_ref)
        s2_ref[...] = jnp.zeros_like(s2_ref)

    s1_ref[...] += ps1
    s2_ref[...] += ps2


def _gn_apply_kernel(x_ref, scale_ref, shift_ref, o_ref):
    """Two-pass path, pass 2: lane-dense x * scale + shift with per-channel params."""
    if o_ref.dtype == jnp.bfloat16:
        o_ref[...] = (x_ref[...] * scale_ref[...].astype(jnp.bfloat16)
                      + shift_ref[...].astype(jnp.bfloat16)).astype(o_ref.dtype)
    else:
        o_ref[...] = (x_ref[...].astype(jnp.float32) * scale_ref[...]
                      + shift_ref[...]).astype(o_ref.dtype)


# ---------------------------------------------------------------------------
# Tiling / VMEM heuristics
# ---------------------------------------------------------------------------

def _vmem_capacity_bytes():
    try:
        info = pltpu.get_tpu_info()
        cap = getattr(info, "vmem_capacity_bytes", None)
        if cap:
            return int(cap)
    except Exception:
        pass
    return 64 << 20  # conservative default (v7x per-TensorCore VMEM)


def _channel_block_candidates(C, Cg):
    """Channel-block sizes covering whole groups that satisfy the (8,128) rule."""
    G = C // Cg
    cands = sorted({Cg * k for k in range(1, G + 1) if G % k == 0})
    ok = [bc for bc in cands if bc % 8 == 0 or bc == C]
    return ok if ok else [C]


def _pick_fused_channel_block(C, Cg, HW, itemsize, target_bytes):
    ok = _channel_block_candidates(C, Cg)
    fitting = [bc for bc in ok
               if bc * HW * itemsize <= target_bytes and bc * bc * 4 <= (2 << 20)]
    return max(fitting) if fitting else min(ok)


def _pick_batch_block(N, Bc, C, HW, itemsize, target_bytes):
    if Bc != C or N <= 1:
        return 1
    cap = max(1, N // 2)  # keep >= 2 grid steps for the 2 TensorCores on v7x
    best = 1
    for bn in range(1, cap + 1):
        if N % bn != 0:
            continue
        if bn * C * HW * itemsize > target_bytes:
            continue
        if bn * Bc * Bc * 4 > (4 << 20):
            continue
        best = bn
    return best


def _pick_hw_tile(HW, Bc, itemsize, target_bytes):
    best = None
    for t in range(128, HW + 1, 128):
        if HW % t == 0 and Bc * t * itemsize <= target_bytes:
            best = t
    if best is None:
        # TODO(synk): HW not divisible by 128 (or even one 128-wide chunk too
        # big): fall back to the full extent (stores become masked).
        best = HW
    return best


# ---------------------------------------------------------------------------
# Wrapper
# ---------------------------------------------------------------------------

def _fused_path(x3, w32, b32, Cg, eps, Bc, Bn, safe_vmem, fused_need):
    N, C, HW = x3.shape
    grid = (C // Bc, N // Bn)

    # Per-channel params, pre-grouped by channel block so each step's slice is a
    # whole last-dim block (no (8,128) issue, no dynamic slicing in-kernel).
    w3 = w32.reshape(C // Bc, 1, Bc)
    b3 = b32.reshape(C // Bc, 1, Bc)
    # Block-diagonal "same group" mask (identical for every channel block since
    # blocks start on group boundaries).
    ch = jnp.arange(Bc, dtype=jnp.int32)
    agg = (ch[:, None] // Cg == ch[None, :] // Cg).astype(jnp.float32)

    kernel = functools.partial(_gn_fused_kernel, eps=float(eps),
                               inv_count=1.0 / float(Cg * HW))
    vmem_limit = min(safe_vmem, max(fused_need, 32 << 20))

    return pl.pallas_call(
        kernel,
        out_shape=jax.ShapeDtypeStruct((N, C, HW), x3.dtype),
        grid_spec=pltpu.PrefetchScalarGridSpec(
            num_scalar_prefetch=0,
            grid=grid,
            in_specs=[
                pl.BlockSpec((Bn, Bc, HW), lambda cb, nb: (nb, cb, 0)),
                # Constant along the inner (batch) axis -> stays VMEM-resident.
                pl.BlockSpec((1, 1, Bc), lambda cb, nb: (cb, 0, 0)),
                pl.BlockSpec((1, 1, Bc), lambda cb, nb: (cb, 0, 0)),
                pl.BlockSpec((Bc, Bc), lambda cb, nb: (0, 0)),
            ],
            out_specs=pl.BlockSpec((Bn, Bc, HW), lambda cb, nb: (nb, cb, 0)),
        ),
        compiler_params=pltpu.CompilerParams(
            dimension_semantics=("parallel", "parallel"),
            vmem_limit_bytes=vmem_limit),
    )(x3, w3, b3, agg)


def _two_pass_path(x3, w32, b32, G, Cg, eps, safe_vmem, tile_target_bytes):
    N, C, HW = x3.shape
    itemsize = x3.dtype.itemsize
    Bc = min(_channel_block_candidates(C, Cg))
    THW = _pick_hw_tile(HW, Bc, itemsize, tile_target_bytes)
    grid = (C // Bc, N, HW // THW)

    tile_bytes = Bc * THW * itemsize
    need = 4 * tile_bytes + 3 * Bc * THW * 4 + (2 << 20)
    vmem_limit = min(safe_vmem, max(need, 32 << 20))

    # Pass 1: per-channel sum / sum-of-squares accumulated over HW chunks.
    s1, s2 = pl.pallas_call(
        _gn_stats_kernel,
        out_shape=(jax.ShapeDtypeStruct((N, C, 1), jnp.float32),
                   jax.ShapeDtypeStruct((N, C, 1), jnp.float32)),
        grid_spec=pltpu.PrefetchScalarGridSpec(
            num_scalar_prefetch=0,
            grid=grid,
            in_specs=[pl.BlockSpec((1, Bc, THW), lambda cb, n, kh: (n, cb, kh))],
            out_specs=(pl.BlockSpec((1, Bc, 1), lambda cb, n, kh: (n, cb, 0)),
                       pl.BlockSpec((1, Bc, 1), lambda cb, n, kh: (n, cb, 0))),
        ),
        compiler_params=pltpu.CompilerParams(
            dimension_semantics=("parallel", "parallel", "arbitrary"),
            vmem_limit_bytes=vmem_limit),
    )(x3)

    # Tiny per-group math in plain XLA (N*G scalars).
    cnt = float(Cg * HW)
    s1g = s1.reshape(N, G, Cg).sum(axis=-1)
    s2g = s2.reshape(N, G, Cg).sum(axis=-1)
    mean = s1g / cnt
    var = jnp.maximum(s2g / cnt - mean * mean, 0.0)
    inv_std = jax.lax.rsqrt(var + eps)                           # (N, G)
    w_g = w32.reshape(1, G, Cg)
    b_g = b32.reshape(1, G, Cg)
    scale_gc = w_g * inv_std[:, :, None]                         # (N, G, Cg)
    scale_c = scale_gc.reshape(N, C, 1)
    shift_c = (b_g - mean[:, :, None] * scale_gc).reshape(N, C, 1)

    # Pass 2: lane-dense normalize sweep.
    return pl.pallas_call(
        _gn_apply_kernel,
        out_shape=jax.ShapeDtypeStruct((N, C, HW), x3.dtype),
        grid_spec=pltpu.PrefetchScalarGridSpec(
            num_scalar_prefetch=0,
            grid=grid,
            in_specs=[
                pl.BlockSpec((1, Bc, THW), lambda cb, n, kh: (n, cb, kh)),
                # Constant along the inner HW axis -> stays VMEM-resident.
                pl.BlockSpec((1, Bc, 1), lambda cb, n, kh: (n, cb, 0)),
                pl.BlockSpec((1, Bc, 1), lambda cb, n, kh: (n, cb, 0)),
            ],
            out_specs=pl.BlockSpec((1, Bc, THW), lambda cb, n, kh: (n, cb, kh)),
        ),
        compiler_params=pltpu.CompilerParams(
            dimension_semantics=("parallel", "parallel", "parallel"),
            vmem_limit_bytes=vmem_limit),
    )(x3, scale_c, shift_c)


def naive_group_norm(x, weight, bias, num_groups, eps=1e-5, *,
                     tile_target_bytes=4 << 20, force_two_pass=False):
    N, C, H, W = x.shape
    assert C % num_groups == 0
    Cg = C // num_groups
    HW = H * W
    itemsize = x.dtype.itemsize

    x3 = x.reshape(N, C, HW)                 # channel-dense / lane-dense layout
    w32 = weight.astype(jnp.float32)
    b32 = bias.astype(jnp.float32)

    vmem_cap = _vmem_capacity_bytes()
    safe_vmem = int(0.85 * vmem_cap)

    Bc = _pick_fused_channel_block(C, Cg, HW, itemsize, tile_target_bytes)
    Bn = _pick_batch_block(N, Bc, C, HW, itemsize, tile_target_bytes)
    block_bytes = Bn * Bc * HW * itemsize
    block_f32 = Bn * Bc * HW * 4
    # 2x double-buffered in + 2x out + f32 working copies + slack.
    fused_need = 4 * block_bytes + 3 * block_f32 + (2 << 20)

    use_two_pass = (force_two_pass
                    or fused_need > safe_vmem
                    or Bc * Bc * 4 > (2 << 20))

    if use_two_pass:
        out3 = _two_pass_path(x3, w32, b32, num_groups, Cg, eps,
                              safe_vmem, tile_target_bytes)
    else:
        out3 = _fused_path(x3, w32, b32, Cg, eps, Bc, Bn, safe_vmem, fused_need)
    return out3.reshape(N, C, H, W)


# ---------------------------------------------------------------------------
# Reference + test
# ---------------------------------------------------------------------------

def _reference_group_norm(x, weight, bias, num_groups, eps=1e-5):
    N, C, H, W = x.shape
    xr = x.reshape(N, num_groups, -1)
    mean = xr.mean(axis=-1, keepdims=True)
    var = (xr ** 2).mean(axis=-1, keepdims=True) - mean ** 2
    xn = ((xr - mean) / jnp.sqrt(var + eps)).reshape(N, C, H, W)
    return xn * weight.reshape(1, C, 1, 1) + bias.reshape(1, C, 1, 1)


if __name__ == "__main__":
    N, C, H, W = 2, 4, 16, 16
    num_groups = 2
    eps = 1e-5

    key = jax.random.PRNGKey(0)
    x = jax.random.normal(key, (N, C, H, W), dtype=jnp.float32)
    # Module init is ones/zeros; use deterministic non-trivial values so the
    # affine scale/shift path is actually validated.
    weight = 1.0 + 0.1 * jnp.arange(C, dtype=jnp.float32)
    bias = 0.05 * jnp.arange(C, dtype=jnp.float32) - 0.1

    ref = _reference_group_norm(x, weight, bias, num_groups, eps)

    # Fused single-pass path (default when tiles fit in VMEM).
    out = jax.block_until_ready(naive_group_norm(x, weight, bias, num_groups, eps))
    assert out.shape == (N, C, H, W)
    assert jnp.allclose(out, ref, atol=1e-5, rtol=1e-5)

    # Also exercise the two-pass (stats + normalize) path used for large tiles,
    # with a small HW tile so the in-kernel accumulation loop is covered.
    out2 = jax.block_until_ready(
        naive_group_norm(x, weight, bias, num_groups, eps,
                         tile_target_bytes=2048, force_two_pass=True))
    assert jnp.allclose(out2, ref, atol=1e-5, rtol=1e-5)

    print("KERNEL_OK")
</pallas_src>

<mosaic_0001>
module attributes {stable_mosaic.version = 11 : i64} {
  func.func @_gn_fused_kernel(%arg0: i32, %arg1: i32, %arg2: memref<1x4x256xf32, #tpu.memory_space<vmem>>, %arg3: memref<1x1x4xf32, #tpu.memory_space<vmem>>, %arg4: memref<1x1x4xf32, #tpu.memory_space<vmem>>, %arg5: memref<4x4xf32, #tpu.memory_space<vmem>>, %arg6: memref<1x4x256xf32, #tpu.memory_space<vmem>>) attributes {dimension_semantics = [#tpu.dimension_semantics<parallel>, #tpu.dimension_semantics<parallel>], iteration_bounds = array<i64: 1, 2>, scalar_prefetch = 0 : i64, scratch_operands = 0 : i64, tpu.core_type = #tpu.core_type<tc>, window_params = [{transform_indices = @transform_0, window_bounds = array<i64: 1, 4, 256>}, {transform_indices = @transform_1, window_bounds = array<i64: 1, 1, 4>}, {transform_indices = @transform_2, window_bounds = array<i64: 1, 1, 4>}, {pipeline_mode = #tpu.pipeline_mode<synchronous>, transform_indices = @transform_3, window_bounds = array<i64: 4, 4>}, {transform_indices = @transform_4, window_bounds = array<i64: 1, 4, 256>}]} {
    %c0 = arith.constant 0 : index
    %c0_0 = arith.constant 0 : index
    %c0_1 = arith.constant 0 : index
    %0 = vector.load %arg2[%c0, %c0_0, %c0_1] : memref<1x4x256xf32, #tpu.memory_space<vmem>>, vector<1x4x256xf32>
    %cst = arith.constant dense<0.000000e+00> : vector<1x4xf32>
    %1 = vector.multi_reduction <add>, %0, %cst [2] : vector<1x4x256xf32> to vector<1x4xf32>
    %2 = arith.mulf %0, %0 : vector<1x4x256xf32>
    %cst_2 = arith.constant dense<0.000000e+00> : vector<1x4xf32>
    %3 = vector.multi_reduction <add>, %2, %cst_2 [2] : vector<1x4x256xf32> to vector<1x4xf32>
    %c0_3 = arith.constant 0 : index
    %c0_4 = arith.constant 0 : index
    %4 = vector.load %arg5[%c0_3, %c0_4] : memref<4x4xf32, #tpu.memory_space<vmem>>, vector<4x4xf32>
    %5 = vector.shape_cast %1 : vector<1x4xf32> to vector<1x1x4xf32>
    %6 = vector.shape_cast %4 : vector<4x4xf32> to vector<1x4x4xf32>
    %7 = vector.broadcast %5 : vector<1x1x4xf32> to vector<1x4x4xf32>
    %8 = arith.mulf %7, %6 : vector<1x4x4xf32>
    %cst_5 = arith.constant dense<0.000000e+00> : vector<1x4xf32>
    %9 = vector.multi_reduction <add>, %8, %cst_5 [2] : vector<1x4x4xf32> to vector<1x4xf32>
    %10 = vector.shape_cast %3 : vector<1x4xf32> to vector<1x1x4xf32>
    %11 = vector.shape_cast %4 : vector<4x4xf32> to vector<1x4x4xf32>
    %12 = vector.broadcast %10 : vector<1x1x4xf32> to vector<1x4x4xf32>
    %13 = arith.mulf %12, %11 : vector<1x4x4xf32>
    %cst_6 = arith.constant dense<0.000000e+00> : vector<1x4xf32>
    %14 = vector.multi_reduction <add>, %13, %cst_6 [2] : vector<1x4x4xf32> to vector<1x4xf32>
    %cst_7 = arith.constant 0.001953125 : f32
    %15 = vector.broadcast %cst_7 : f32 to vector<1x4xf32>
    %16 = arith.mulf %9, %15 : vector<1x4xf32>
    %cst_8 = arith.constant 0.001953125 : f32
    %17 = vector.broadcast %cst_8 : f32 to vector<1x4xf32>
    %18 = arith.mulf %14, %17 : vector<1x4xf32>
    %19 = arith.mulf %16, %16 : vector<1x4xf32>
    %20 = arith.subf %18, %19 : vector<1x4xf32>
    %cst_9 = arith.constant 0.000000e+00 : f32
    %21 = vector.broadcast %cst_9 : f32 to vector<1x4xf32>
    %22 = arith.maximumf %20, %21 : vector<1x4xf32>
    %cst_10 = arith.constant 9.99999974E-6 : f32
    %23 = vector.broadcast %cst_10 : f32 to vector<1x4xf32>
    %24 = arith.addf %22, %23 : vector<1x4xf32>
    %25 = math.rsqrt %24 : vector<1x4xf32>
    %c0_11 = arith.constant 0 : index
    %c0_12 = arith.constant 0 : index
    %c0_13 = arith.constant 0 : index
    %26 = vector.load %arg3[%c0_11, %c0_12, %c0_13] : memref<1x1x4xf32, #tpu.memory_space<vmem>>, vector<1x1x4xf32>
    %27 = vector.shape_cast %26 : vector<1x1x4xf32> to vector<1x4xf32>
    %c0_14 = arith.constant 0 : index
    %c0_15 = arith.constant 0 : index
    %c0_16 = arith.constant 0 : index
    %28 = vector.load %arg4[%c0_14, %c0_15, %c0_16] : memref<1x1x4xf32, #tpu.memory_space<vmem>>, vector<1x1x4xf32>
    %29 = vector.shape_cast %28 : vector<1x1x4xf32> to vector<1x4xf32>
    %30 = arith.mulf %27, %25 : vector<1x4xf32>
    %31 = arith.mulf %16, %30 : vector<1x4xf32>
    %32 = arith.subf %29, %31 : vector<1x4xf32>
    %c0_17 = arith.constant 0 : index
    %c0_18 = arith.constant 0 : index
    %c0_19 = arith.constant 0 : index
    %33 = vector.load %arg2[%c0_17, %c0_18, %c0_19] : memref<1x4x256xf32, #tpu.memory_space<vmem>>, vector<1x4x256xf32>
    %34 = vector.shape_cast %30 : vector<1x4xf32> to vector<1x4x1xf32>
    %35 = vector.broadcast %34 : vector<1x4x1xf32> to vector<1x4x256xf32>
    %36 = arith.mulf %33, %35 : vector<1x4x256xf32>
    %37 = vector.shape_cast %32 : vector<1x4xf32> to vector<1x4x1xf32>
    %38 = vector.broadcast %37 : vector<1x4x1xf32> to vector<1x4x256xf32>
    %39 = arith.addf %36, %38 : vector<1x4x256xf32>
    %c0_20 = arith.constant 0 : index
    %c0_21 = arith.constant 0 : index
    %c0_22 = arith.constant 0 : index
    %40 = vector.load %arg6[%c0_20, %c0_21, %c0_22] : memref<1x4x256xf32, #tpu.memory_space<vmem>>, vector<1x4x256xf32>
    tpu.vector_store %arg6[%c0_20, %c0_21, %c0_22], %39 {strides = array<i32>} : memref<1x4x256xf32, #tpu.memory_space<vmem>>, vector<1x4x256xf32>,
    return
  }
  func.func @transform_0(%arg0: i32, %arg1: i32) -> (i32, i32, i32) {
    %c0_i32 = arith.constant 0 : i32
    %c0_i32_0 = arith.constant 0 : i32
    return %arg1, %arg0, %c0_i32 : i32, i32, i32
  }
  func.func @transform_1(%arg0: i32, %arg1: i32) -> (i32, i32, i32) {
    %c0_i32 = arith.constant 0 : i32
    %c0_i32_0 = arith.constant 0 : i32
    %c0_i32_1 = arith.constant 0 : i32
    return %arg0, %c0_i32, %c0_i32_0 : i32, i32, i32
  }
  func.func @transform_2(%arg0: i32, %arg1: i32) -> (i32, i32, i32) {
    %c0_i32 = arith.constant 0 : i32
    %c0_i32_0 = arith.constant 0 : i32
    %c0_i32_1 = arith.constant 0 : i32
    return %arg0, %c0_i32, %c0_i32_0 : i32, i32, i32
  }
  func.func @transform_3(%arg0: i32, %arg1: i32) -> (i32, i32) {
    %c0_i32 = arith.constant 0 : i32
    %c0_i32_0 = arith.constant 0 : i32
    %c0_i32_1 = arith.constant 0 : i32
    return %c0_i32, %c0_i32_0 : i32, i32
  }
  func.func @transform_4(%arg0: i32, %arg1: i32) -> (i32, i32, i32) {
    %c0_i32 = arith.constant 0 : i32
    %c0_i32_0 = arith.constant 0 : i32
    return %arg1, %arg0, %c0_i32 : i32, i32, i32
  }
}

</mosaic_0001>

<llo_original>
// kernel: tpu_custom_call.1
$region0: #{tpu_custom_call.1}
  #allocation0 [shape = 'u32[]', space=smem, size = 0x4, offset = 0x4, fixed_abs, tag = 'smem constant byte address 0x4 - core index']
  #allocation1 [shape = 'u32[72,128]{1,0:T(1,128)}', space=vmem, size = 0x9000, scoped, tag = 'internal scratch']
  %s0 = inlined_call_operand.hbm [shape: f32[2,4,256], index: 0, kind: input, shape index: {}]
  %s1 = inlined_call_operand.hbm [shape: f32[1,1,4], index: 1, kind: input, shape index: {}]
  %s2 = inlined_call_operand.vmem [shape: f32[1,1,4], index: 2, kind: input, shape index: {}]
  %s3 = inlined_call_operand.hbm [shape: f32[4,4], index: 3, kind: input, shape index: {}]
  %s4 = inlined_call_operand.hbm [shape: f32[2,4,256], index: 4, kind: output, shape index: {}]
  %s5 = sld [smem:[#allocation0]]
  $region61: #{tpu_custom_call.1} parent=0
    _
  %s7 = ssub.s32 1, %s5
  %s8 = scalar_select 0, %s7, %s5
  $region1: #{tpu_custom_call.1} parent=0
    #allocation2 [shape = 'u8[8192]{0}', space=vmem, size = 0x2000, scoped, tag = 'input window, operand 0']
    #allocation3 [shape = 's32[2]{0}', space=sflag, size = 0x8, scoped, tag = 'scoped memory for tpu_custom_call.1']
    #allocation4 [shape = 's32[2]{0}', space=sflag, size = 0x8, scoped, tag = 'scoped memory for tpu_custom_call.1']
    #allocation5 [shape = 'u8[512]{0}', space=vmem, size = 0x400, scoped, tag = 'input window, operand 1, single buffered']
    #allocation6 [shape = 's32[1]{0}', space=sflag, size = 0x4, scoped, tag = 'scoped memory for tpu_custom_call.1']
    #allocation7 [shape = 'u8[2048]{0}', space=vmem, size = 0x800, scoped, tag = 'input window, operand 3, single buffered']
    #allocation8 [shape = 'u8[8192]{0}', space=vmem, size = 0x2000, scoped, tag = 'output window, operand 0']
    %9 = vsyncpa [#allocation3], 0
    %s10 = scalar_lea.sflag [#allocation3], 1
    %11 = vsyncpa %s10, 0
    %12 = vsyncpa [#allocation6], 0
    %13 = vsyncpa [#allocation4], 0
    %s14 = scalar_lea.sflag [#allocation4], 1
    %15 = vsyncpa %s14, 0
    loop: start=0, step=1, limit=4
    $region2: #{tpu_custom_call.1} parent=1 // loop_pre_header
      _
    $region3: #{tpu_custom_call.1} parent=1 // loop_header
      %s17 = sphi 0, %s21
      %p18 = scmp.ge.s32.totalorder %s17, 4
      %s24 = sphi 0, %s36
      %s25 = sphi 0, %s32
      %s26 = sphi 0, %s24
      %s27 = sphi 0, %s25
      %s28 = sphi 0, %s26
      %s29 = sphi 0, %s27
      %s41 = sphi 0, %s43
      %s44 = sphi 0, %s41
      %s45 = sphi 0, %s44
      %s61 = sphi 0, %s45
      %s67 = sphi 0, %s69
      %s70 = sphi 0, %s67
      %s71 = sphi 0, %s70
      %s87 = sphi 0, %s71
      %s93 = sphi 0, %s95
      %s96 = sphi 0, %s93
      %s97 = sphi 0, %s96
      %s113 = sphi 0, %s97
      %s117 = sphi 0, %s117
      %s119 = sphi 0, %s117
      %s120 = sphi 0, %s119
      %s134 = sphi 0, %s120
      %s142 = sphi 0, %s144
      %s145 = sphi 0, %s142
      %s146 = sphi 0, %s145
      %s162 = sphi 0, %s146
    $region4: #{tpu_custom_call.1} parent=1 // loop_header_branch
      %20 = sbr.rel (%p18) target = $region8
    $region5: #{tpu_custom_call.1} parent=1 // loop_body
      %s22 = ssub.s32 %s17, 1
      %s23 = ssub.s32 %s17, 2
      %s30 = sadd.s32 1, %s25
      %p31 = scmp.ge.s32.totalorder %s30, 2
      %s32 = scalar_select %p31, 0, %s30
      %s33 = sadd.s32 1, %s24
      %s34 = scalar_select %p31, %s33, %s24
      %p35 = scmp.ge.s32.totalorder %s34, 1
      %s36 = scalar_select %p35, 0, %s34
      %s37 = ssub.s32 %s25, %s32
      %s38 = ssub.s32 %s24, %s36
      %s39 = sor.u32 %s37, %s38
      %p40 = scmp.eq.s32.totalorder %s39, 0
      %s42 = sadd.s32 %s41, 1
      %s43 = scalar_select %p40, %s41, %s42
      %p46 = pneg %p40
      %p47 = scmp.eq.s32.totalorder %s17, 1
      %p48 = por %p46, %p47
      %p49 = scmp.ne.s32.totalorder %s41, %s44
      %p50 = scmp.eq.s32.totalorder %s17, 0
      %p51 = por %p49, %p50
      %p52 = scmp.ne.s32.totalorder %s41, %s44
      %p53 = scmp.eq.s32.totalorder %s22, 1
      %p54 = por %p52, %p53
      %p55 = scmp.ne.s32.totalorder %s44, %s45
      %p56 = scmp.eq.s32.totalorder %s22, 0
      %p57 = por %p55, %p56
      %p58 = scmp.ne.s32.totalorder %s44, %s45
      %p59 = scmp.eq.s32.totalorder %s23, 1
      %p60 = por %p58, %p59
      %p62 = scmp.ne.s32.totalorder %s45, %s61
      %p63 = scmp.eq.s32.totalorder %s23, 0
      %p64 = por %p62, %p63
      %s65 = ssub.s32 %s24, %s36
      %p66 = scmp.eq.s32.totalorder %s65, 0
      %s68 = sadd.s32 %s67, 1
      %s69 = scalar_select %p66, %s67, %s68
      %p72 = pneg %p66
      %p73 = scmp.eq.s32.totalorder %s17, 1
      %p74 = por %p72, %p73
      %p75 = scmp.ne.s32.totalorder %s67, %s70
      %p76 = scmp.eq.s32.totalorder %s17, 0
      %p77 = por %p75, %p76
      %p78 = scmp.ne.s32.totalorder %s67, %s70
      %p79 = scmp.eq.s32.totalorder %s22, 1
      %p80 = por %p78, %p79
      %p81 = scmp.ne.s32.totalorder %s70, %s71
      %p82 = scmp.eq.s32.totalorder %s22, 0
      %p83 = por %p81, %p82
      %p84 = scmp.ne.s32.totalorder %s70, %s71
      %p85 = scmp.eq.s32.totalorder %s23, 1
      %p86 = por %p84, %p85
      %p88 = scmp.ne.s32.totalorder %s71, %s87
      %p89 = scmp.eq.s32.totalorder %s23, 0
      %p90 = por %p88, %p89
      %s91 = ssub.s32 %s24, %s36
      %p92 = scmp.eq.s32.totalorder %s91, 0
      %s94 = sadd.s32 %s93, 1
      %s95 = scalar_select %p92, %s93, %s94
      %p98 = pneg %p92
      %p99 = scmp.eq.s32.totalorder %s17, 1
      %p100 = por %p98, %p99
      %p101 = scmp.ne.s32.totalorder %s93, %s96
      %p102 = scmp.eq.s32.totalorder %s17, 0
      %p103 = por %p101, %p102
      %p104 = scmp.ne.s32.totalorder %s93, %s96
      %p105 = scmp.eq.s32.totalorder %s22, 1
      %p106 = por %p104, %p105
      %p107 = scmp.ne.s32.totalorder %s96, %s97
      %p108 = scmp.eq.s32.totalorder %s22, 0
      %p109 = por %p107, %p108
      %p110 = scmp.ne.s32.totalorder %s96, %s97
      %p111 = scmp.eq.s32.totalorder %s23, 1
      %p112 = por %p110, %p111
      %p114 = scmp.ne.s32.totalorder %s97, %s113
      %p115 = scmp.eq.s32.totalorder %s23, 0
      %p116 = por %p114, %p115
      %s118 = sadd.s32 %s117, 1
      %p121 = scmp.eq.s32.totalorder %s17, 1
      %p122 = scmp.ne.s32.totalorder %s117, %s119
      %p123 = scmp.eq.s32.totalorder %s17, 0
      %p124 = por %p122, %p123
      %p125 = scmp.ne.s32.totalorder %s117, %s119
      %p126 = scmp.eq.s32.totalorder %s22, 1
      %p127 = por %p125, %p126
      %p128 = scmp.ne.s32.totalorder %s119, %s120
      %p129 = scmp.eq.s32.totalorder %s22, 0
      %p130 = por %p128, %p129
      %p131 = scmp.ne.s32.totalorder %s119, %s120
      %p132 = scmp.eq.s32.totalorder %s23, 1
      %p133 = por %p131, %p132
      %p135 = scmp.ne.s32.totalorder %s120, %s134
      %p136 = scmp.eq.s32.totalorder %s23, 0
      %p137 = por %p135, %p136
      %s138 = ssub.s32 %s25, %s32
      %s139 = ssub.s32 %s24, %s36
      %s140 = sor.u32 %s138, %s139
      %p141 = scmp.eq.s32.totalorder %s140, 0
      %s143 = sadd.s32 %s142, 1
      %s144 = scalar_select %p141, %s142, %s143
      %p147 = pneg %p141
      %p148 = scmp.eq.s32.totalorder %s17, 1
      %p149 = por %p147, %p148
      %p150 = scmp.ne.s32.totalorder %s142, %s145
      %p151 = scmp.eq.s32.totalorder %s17, 0
      %p152 = por %p150, %p151
      %p153 = scmp.ne.s32.totalorder %s142, %s145
      %p154 = scmp.eq.s32.totalorder %s22, 1
      %p155 = por %p153, %p154
      %p156 = scmp.ne.s32.totalorder %s145, %s146
      %p157 = scmp.eq.s32.totalorder %s22, 0
      %p158 = por %p156, %p157
      %p159 = scmp.ne.s32.totalorder %s145, %s146
      %p160 = scmp.eq.s32.totalorder %s23, 1
      %p161 = por %p159, %p160
      %p163 = scmp.ne.s32.totalorder %s146, %s162
      %p164 = scmp.eq.s32.totalorder %s23, 0
      %p165 = por %p163, %p164
      %p166 = scmp.le.s32.totalorder 1, %s17
      %p167 = scmp.lt.s32.totalorder %s17, 3
      %p168 = pnand %p166, %p167
      %p169 = pneg %p168
      // Predicated region
      $region9: #{tpu_custom_call.1} parent=5 // pred_check
        _
      $region10: #{tpu_custom_call.1} parent=5 // pred_check_branch
        %171 = sbr.rel (%p168) target = $region12
      $region11: #{tpu_custom_call.1} parent=5 // pred_region
        %s172 = ssub.s32 %s17, 1
        // Predicated region
        $region13: #{tpu_custom_call.1} parent=11 // pred_check
          %p173 = pneg %p83
        $region14: #{tpu_custom_call.1} parent=11 // pred_check_branch
          %175 = sbr.rel (%p173) target = $region16
        $region15: #{tpu_custom_call.1} parent=11 // pred_region
          %177 = vsyncadd [#allocation6], 0
          %s178 = scalar_lea.hbm %s1, %s26
          %s180 = sshll.u32 %s178, 4
          %s181 = int_to_ptr.hbm [resolvable:$true] %s180
          %s182 = sshll.u32 [#allocation5], 4
          %s183 = int_to_ptr.vmem [resolvable:$true] %s182
          %185 = dma.hbm_to_vmem [thread:$0]  %s181, 16, %s183, [#allocation6]
        $region16: #{tpu_custom_call.1} parent=11 // pred_fallthru
          _
        // Predicated region
        $region17: #{tpu_custom_call.1} parent=11 // pred_check
          %p186 = pneg %p109
        $region18: #{tpu_custom_call.1} parent=11 // pred_check_branch
          %188 = sbr.rel (%p186) target = $region20
        $region19: #{tpu_custom_call.1} parent=11 // pred_region
          %p189 = scmp.lt.s32.totalorder %s26, 0
          %s190 = scalar_select %p189, %s26, 0
          %s191 = scalar_lea.vmem %s2, %s190
        $region20: #{tpu_custom_call.1} parent=11 // pred_fallthru
          _
        // Predicated region
        $region21: #{tpu_custom_call.1} parent=11 // pred_check
          %p192 = pneg %p130
        $region22: #{tpu_custom_call.1} parent=11 // pred_check_branch
          %194 = sbr.rel (%p192) target = $region24
        $region23: #{tpu_custom_call.1} parent=11 // pred_region
          %196 = vsyncadd [#allocation6], 0
          %s198 = sshll.u32 %s3, 4
          %s199 = int_to_ptr.hbm [resolvable:$true] %s198
          %s200 = sshll.u32 [#allocation7], 4
          %s201 = int_to_ptr.vmem [resolvable:$true] %s200
          %203 = dma.hbm_to_vmem [thread:$0]  %s199, 64, %s201, [#allocation6]
        $region24: #{tpu_custom_call.1} parent=11 // pred_fallthru
          _
      $region12: #{tpu_custom_call.1} parent=5 // pred_fallthru
        _
      %p204 = scmp.lt.s32.totalorder %s17, 2
      // Predicated region
      $region25: #{tpu_custom_call.1} parent=5 // pred_check
        %p205 = pneg %p204
      $region26: #{tpu_custom_call.1} parent=5 // pred_check_branch
        %207 = sbr.rel (%p205) target = $region28
      $region27: #{tpu_custom_call.1} parent=5 // pred_region
        // Predicated region
        $region29: #{tpu_custom_call.1} parent=27 // pred_check
          %p208 = pneg %p51
        $region30: #{tpu_custom_call.1} parent=27 // pred_check_branch
          %210 = sbr.rel (%p208) target = $region32
        $region31: #{tpu_custom_call.1} parent=27 // pred_region
          %s211 = sand.u32 %s41, 1
          %s212 = scalar_lea.sflag [#allocation3], %s211
          %s213 = sand.u32 %s41, 1
          %s214 = smul.addr %s213, 8
          %s215 = scalar_lea.vmem [#allocation2], %s214
          %217 = vsyncadd %s212, 0
          %s218 = smul.addr %s24, 2
          %s219 = smul.addr %s25, 2
          %s220 = sadd.s32 %s218, %s219
          %s221 = smul.addr %s220, 4
          %s222 = scalar_lea.hbm %s0, %s221
          %s224 = sshll.u32 %s222, 4
          %s225 = int_to_ptr.hbm [resolvable:$true] %s224
          %s226 = sshll.u32 %s215, 4
          %s227 = int_to_ptr.vmem [resolvable:$true] %s226
          %229 = dma.hbm_to_vmem [thread:$0]  %s225, 128, %s227, %s212
        $region32: #{tpu_custom_call.1} parent=27 // pred_fallthru
          _
      $region28: #{tpu_custom_call.1} parent=5 // pred_fallthru
        _
      %p230 = scmp.le.s32.totalorder 1, %s17
      %p231 = scmp.lt.s32.totalorder %s17, 3
      %p232 = pnand %p230, %p231
      %p233 = pneg %p232
      // Predicated region
      $region33: #{tpu_custom_call.1} parent=5 // pred_check
        _
      $region34: #{tpu_custom_call.1} parent=5 // pred_check_branch
        %235 = sbr.rel (%p232) target = $region36
      $region35: #{tpu_custom_call.1} parent=5 // pred_region
        %s236 = ssub.s32 %s17, 1
        %s237 = sand.u32 %s44, 1
        %s238 = scalar_lea.sflag [#allocation3], %s237
        %s239 = sand.u32 %s44, 1
        %s240 = smul.addr %s239, 8
        %s241 = scalar_lea.vmem [#allocation2], %s240
        // Predicated region
        $region37: #{tpu_custom_call.1} parent=35 // pred_check
          %p242 = pneg %p57
        $region38: #{tpu_custom_call.1} parent=35 // pred_check_branch
          %244 = sbr.rel (%p242) target = $region40
        $region39: #{tpu_custom_call.1} parent=35 // pred_region
          %246 = dma.done %s238, 128
        $region40: #{tpu_custom_call.1} parent=35 // pred_fallthru
          _
        // Predicated region
        $region41: #{tpu_custom_call.1} parent=35 // pred_check
          %p247 = pneg %p83
        $region42: #{tpu_custom_call.1} parent=35 // pred_check_branch
          %249 = sbr.rel (%p247) target = $region44
        $region43: #{tpu_custom_call.1} parent=35 // pred_region
          %251 = dma.done [#allocation6], 16
        $region44: #{tpu_custom_call.1} parent=35 // pred_fallthru
          _
        // Predicated region
        $region45: #{tpu_custom_call.1} parent=35 // pred_check
          %p252 = pneg %p130
        $region46: #{tpu_custom_call.1} parent=35 // pred_check_branch
          %254 = sbr.rel (%p252) target = $region48
        $region47: #{tpu_custom_call.1} parent=35 // pred_region
          %256 = dma.done [#allocation6], 64
        $region48: #{tpu_custom_call.1} parent=35 // pred_fallthru
          _
        %s257 = sand.u32 %s44, 1
        %s258 = scalar_lea.sflag [#allocation3], %s257
        %s259 = sand.u32 %s44, 1
        %s260 = smul.addr %s259, 8
        %s261 = scalar_lea.vmem [#allocation2], %s260
        %p262 = pneg %p57
        %p263 = pneg %p54
        %p264 = pneg %p83
        %p265 = pneg %p80
        %p266 = scmp.lt.s32.totalorder %s26, 0
        %s267 = scalar_select %p266, %s26, 0
        %s268 = scalar_lea.vmem %s2, %s267
        %p269 = pneg %p109
        %p270 = pneg %p106
        %p271 = pneg %p130
        %p272 = pneg %p127
        %p273 = pneg %p158
        %p274 = pneg %p155
        %s275 = sand.u32 %s145, 1
        %s276 = scalar_lea.sflag [#allocation4], %s275
        %s277 = sand.u32 %s145, 1
        %s278 = smul.addr %s277, 8
        %s279 = scalar_lea.vmem [#allocation8], %s278
        %p280 = scmp.lt.s32.totalorder %s26, 0
        %s281 = scalar_select %p280, %s26, 0
        %s282 = scalar_lea.vmem %s2, %s281
        %v283 = vld [vmem:[%s241] sm:$0xff]
        %285 = vst [vmem:[#allocation1] ss:$2 sm:$0xff] %v283
        %v286 = vld.sshfl [vmem:[#allocation1] sm:$0xff pattern:$0x75316420]
        %v287 = vld.sshfl [vmem:[#allocation1 + $0x8] sm:$0xff pattern:$0x75316420]
        %vm290 = vcmask 1043456
        %v291 = vsel %vm290, %v286, 0.0
        %v292 = vsel %vm290, %v287, 0.0
        %v293 = vadd.f32 %v291, %v292
        %294 = vadd.xlane.f32.xlu0 %v293
        %v295 = vpop.xlane.xlu0 %294
        %v296 = vmul.f32 %v283, %v283
        %298 = vst [vmem:[#allocation1] ss:$2 sm:$0xff] %v296
        %v299 = vld.sshfl [vmem:[#allocation1] sm:$0xff pattern:$0x75316420]
        %v300 = vld.sshfl [vmem:[#allocation1 + $0x8] sm:$0xff pattern:$0x75316420]
        %v303 = vsel %vm290, %v299, 0.0
        %v304 = vsel %vm290, %v300, 0.0
        %v305 = vadd.f32 %v303, %v304
        %306 = vadd.xlane.f32.xlu0 %v305
        %v307 = vpop.xlane.xlu0 %306
        %v308 = vld [vmem:[#allocation7] sm:$0xf]
        %v310 = vperm.slane %v308, 0
        %v311 = vlaneseq
        %v312 = vshrl.u32 %v311, 7
        %314 = vset.pattern.permute.xlu0 %v312
        %315 = vperm.xlu0 %314, %v310
        %v316 = vpop.permute.xlu0 %315
        %v317 = vperm.slane %v308, 1
        %v318 = vlaneseq
        %v319 = vshrl.u32 %v318, 7
        %321 = vset.pattern.permute.xlu0 %v319
        %322 = vperm.xlu0 %321, %v317
        %v323 = vpop.permute.xlu0 %322
        %v324 = vperm.slane %v308, 2
        %v325 = vlaneseq
        %v326 = vshrl.u32 %v325, 7
        %328 = vset.pattern.permute.xlu0 %v326
        %329 = vperm.xlu0 %328, %v324
        %v330 = vpop.permute.xlu0 %329
        %v331 = vperm.slane %v308, 3
        %v332 = vlaneseq
        %v333 = vshrl.u32 %v332, 7
        %335 = vset.pattern.permute.xlu0 %v333
        %336 = vperm.xlu0 %335, %v331
        %v337 = vpop.permute.xlu0 %336
        %v342 = vmul.f32 %v295, %v316
        %v343 = vmul.f32 %v295, %v323
        %v344 = vmul.f32 %v295, %v330
        %v345 = vmul.f32 %v295, %v337
        %350 = vset.pattern.permute.xlu0 0
        %351 = vperm.xlu0 %350, %v342
        %v352 = vpop.permute.xlu0 %351
        %353 = vset.pattern.permute.xlu0 0
        %354 = vperm.xlu0 %353, %v343
        %v355 = vpop.permute.xlu0 %354
        %356 = vset.pattern.permute.xlu0 0
        %357 = vperm.xlu0 %356, %v344
        %v358 = vpop.permute.xlu0 %357
        %359 = vset.pattern.permute.xlu0 0
        %360 = vperm.xlu0 %359, %v345
        %v361 = vpop.permute.xlu0 %360
        %v362 = vlaneseq
        %v363 = vand.u32 %v362, 127
        %v364 = vperm.slane %v352, %v363
        %v365 = vperm.slane %v355, %v363
        %v366 = vperm.slane %v358, %v363
        %v367 = vperm.slane %v361, %v363
        %vm368 = vcmask 1041409
        %v369 = vsel %vm368, %v365, %v364
        %vm370 = vcmask 1042434
        %v371 = vsel %vm370, %v366, %v369
        %vm372 = vcmask 1043459
        %v373 = vsel %vm372, %v367, %v371
        %vm375 = vcmask 27648
        %v376 = vsel %vm375, %v373, 0.0
        %377 = vadd.xlane.f32.xlu0 %v376
        %v378 = vpop.xlane.xlu0 %377
        %v379 = vmul.f32 %v307, %v316
        %v380 = vmul.f32 %v307, %v323
        %v381 = vmul.f32 %v307, %v330
        %v382 = vmul.f32 %v307, %v337
        %387 = vset.pattern.permute.xlu0 0
        %388 = vperm.xlu0 %387, %v379
        %v389 = vpop.permute.xlu0 %388
        %390 = vset.pattern.permute.xlu0 0
        %391 = vperm.xlu0 %390, %v380
        %v392 = vpop.permute.xlu0 %391
        %393 = vset.pattern.permute.xlu0 0
        %394 = vperm.xlu0 %393, %v381
        %v395 = vpop.permute.xlu0 %394
        %396 = vset.pattern.permute.xlu0 0
        %397 = vperm.xlu0 %396, %v382
        %v398 = vpop.permute.xlu0 %397
        %v399 = vperm.slane %v389, %v363
        %v400 = vperm.slane %v392, %v363
        %v401 = vperm.slane %v395, %v363
        %v402 = vperm.slane %v398, %v363
        %v403 = vsel %vm368, %v400, %v399
        %v404 = vsel %vm370, %v401, %v403
        %v405 = vsel %vm372, %v402, %v404
        %v407 = vsel %vm375, %v405, 0.0
        %408 = vadd.xlane.f32.xlu0 %v407
        %v409 = vpop.xlane.xlu0 %408
        %v410 = vmul.f32 %v378, 0.001953125
        %v411 = vmul.f32 %v409, 0.001953125
        %v412 = vmul.f32 %v410, %v410
        %v413 = vsub.f32 %v411, %v412
        %v414 = vmax.f32 %v413, 0.0
        %v415 = vadd.f32 %v414, 1e-05
        %v416 = vrsqrt.pop %v415
        %v417 = vmul.f32 %v416, %v415
        %v418 = vmul.f32 %v417, %v416
        %v419 = vmul.f32 0.5, %v418
        %v420 = vsub.f32 1.5, %v419
        %v421 = vmul.f32 %v416, %v420
        %vm422 = vweird.f32 %v415
        %vm423 = vweird.f32 %v416
        %vm424 = vmor %vm422, %vm423
        %v425 = vsel %vm424, %v416, %v421
        %v426 = vld [vmem:[#allocation5] sm:$0x1]
        %v427 = vld [vmem:[%s282] sm:$0x1]
        %v429 = vperm.slane %v425, 0
        %v430 = vperm.slane %v425, 1
        %v431 = vperm.slane %v425, 2
        %v432 = vperm.slane %v425, 3
        %433 = vst [vmem:[#allocation1] ss:$9 sm:$0xff] %v429
        %s434 = scalar_lea.vmem [#allocation1], 1
        %435 = vst [vmem:[%s434] ss:$9 sm:$0xff] %v430
        %s436 = scalar_lea.vmem [#allocation1], 2
        %437 = vst [vmem:[%s436] ss:$9 sm:$0xff] %v431
        %s438 = scalar_lea.vmem [#allocation1], 3
        %439 = vst [vmem:[%s438] ss:$9 sm:$0xff] %v432
        %v440 = vld [vmem:[#allocation1] sm:$0xff]
        %441 = vset.pattern.permute.xlu0 0
        %442 = vperm.xlu0 %441, %v440
        %v443 = vpop.permute.xlu0 %442
        %v444 = vperm.slane %v443, %v363
        %v446 = vmul.f32 %v426, %v444
        %v448 = vperm.slane %v446, 0
        %v449 = vlaneseq
        %v450 = vshrl.u32 %v449, 7
        %452 = vset.pattern.permute.xlu0 %v450
        %453 = vperm.xlu0 %452, %v448
        %v454 = vpop.permute.xlu0 %453
        %v456 = vmul.f32 %v410, %v454
        %v458 = vrot.slane %v456, 1
        %v459 = vrot.slane %v456, 2
        %v460 = vrot.slane %v456, 3
        %461 = vst [vmem:[#allocation1] ss:$9 sm:$0xff] %v456
        %s462 = scalar_lea.vmem [#allocation1], 1
        %463 = vst [vmem:[%s462] ss:$9 sm:$0xff] %v458
        %s464 = scalar_lea.vmem [#allocation1], 2
        %465 = vst [vmem:[%s464] ss:$9 sm:$0xff] %v459
        %s466 = scalar_lea.vmem [#allocation1], 3
        %467 = vst [vmem:[%s466] ss:$9 sm:$0xff] %v460
        %v468 = vld [vmem:[#allocation1] sm:$0xff]
        %469 = vset.pattern.permute.xlu0 0
        %470 = vperm.xlu0 %469, %v468
        %v471 = vpop.permute.xlu0 %470
        %v472 = vperm.slane %v471, %v363
        %v474 = vsub.f32 %v427, %v472
        %v475 = vperm.slane %v446, 0
        %v476 = vlaneseq
        %v477 = vshrl.u32 %v476, 7
        %479 = vset.pattern.permute.xlu0 %v477
        %480 = vperm.xlu0 %479, %v475
        %v481 = vpop.permute.xlu0 %480
        %v484 = vunpack.c.l.s4 839922192
        %v485 = vunpack.c.0.s8 %v484
        %v486 = vperm.slane %v481, %v485
        %v488 = vmul.f32 %v283, %v486
        %v489 = vperm.slane %v474, 0
        %v490 = vlaneseq
        %v491 = vshrl.u32 %v490, 7
        %493 = vset.pattern.permute.xlu0 %v491
        %494 = vperm.xlu0 %493, %v489
        %v495 = vpop.permute.xlu0 %494
        %v498 = vunpack.c.l.s4 839922192
        %v499 = vunpack.c.0.s8 %v498
        %v500 = vperm.slane %v495, %v499
        %v502 = vadd.f32 %v488, %v500
        %503 = vst [vmem:[%s279] sm:$0xff] %v502
        %s504 = sand.u32 %s145, 1
        %s505 = scalar_lea.sflag [#allocation4], %s504
        %s506 = sand.u32 %s145, 1
        %s507 = smul.addr %s506, 8
        %s508 = scalar_lea.vmem [#allocation8], %s507
        // Predicated region
        $region49: #{tpu_custom_call.1} parent=35 // pred_check
          %p509 = pneg %p155
        $region50: #{tpu_custom_call.1} parent=35 // pred_check_branch
          %511 = sbr.rel (%p509) target = $region52
        $region51: #{tpu_custom_call.1} parent=35 // pred_region
          %513 = vsyncadd %s505, 0
          %s514 = smul.addr %s26, 2
          %s515 = smul.addr %s27, 2
          %s516 = sadd.s32 %s514, %s515
          %s517 = smul.addr %s516, 4
          %s518 = scalar_lea.hbm %s4, %s517
          %s520 = sshll.u32 %s508, 4
          %s521 = int_to_ptr.vmem [resolvable:$true] %s520
          %s522 = sshll.u32 %s518, 4
          %s523 = int_to_ptr.hbm [resolvable:$true] %s522
          %525 = dma.vmem_to_hbm [thread:$0]  %s521, 128, %s523, %s505
        $region52: #{tpu_custom_call.1} parent=35 // pred_fallthru
          _
      $region36: #{tpu_custom_call.1} parent=5 // pred_fallthru
        _
      %p526 = scmp.le.s32.totalorder 2, %s17
      // Predicated region
      $region53: #{tpu_custom_call.1} parent=5 // pred_check
        %p527 = pneg %p526
      $region54: #{tpu_custom_call.1} parent=5 // pred_check_branch
        %529 = sbr.rel (%p527) target = $region56
      $region55: #{tpu_custom_call.1} parent=5 // pred_region
        %s530 = ssub.s32 %s17, 2
        // Predicated region
        $region57: #{tpu_custom_call.1} parent=55 // pred_check
          %p531 = pneg %p161
        $region58: #{tpu_custom_call.1} parent=55 // pred_check_branch
          %533 = sbr.rel (%p531) target = $region60
        $region59: #{tpu_custom_call.1} parent=55 // pred_region
          %s534 = sand.u32 %s146, 1
          %s535 = scalar_lea.sflag [#allocation4], %s534
          %s536 = sand.u32 %s146, 1
          %s537 = smul.addr %s536, 8
          %s538 = scalar_lea.vmem [#allocation8], %s537
          %540 = dma.done %s535, 128
        $region60: #{tpu_custom_call.1} parent=55 // pred_fallthru
          _
      $region56: #{tpu_custom_call.1} parent=5 // pred_fallthru
        _
    $region6: #{tpu_custom_call.1} parent=1 // loop_footer
      %s21 = sadd.s32 1, %s17
    $region7: #{tpu_custom_call.1} parent=1 // loop_footer_branch
      %16 = sbr.rel target = $region3
    $region8: #{tpu_custom_call.1} parent=1 // loop_exit
      _
    %541 = vsyncpa [#allocation3], 1
    %s542 = scalar_lea.sflag [#allocation3], 1
    %543 = vsyncpa %s542, 1
    %544 = vsyncpa [#allocation6], 1
    %545 = vsyncpa [#allocation4], 1
    %s546 = scalar_lea.sflag [#allocation4], 1
    %547 = vsyncpa %s546, 1

</llo_original>
